<compile_context>
chip_gen: v5e
topology: v5e:2x2
jax: 0.10.0
libtpu: 0.0.40
codegen_flags: <defaults>
</compile_context>

<pallas_src>
from typing import NamedTuple

import jax
import jax.numpy as jnp
from jax.experimental import pallas as pl
from jax.experimental.pallas import tpu as pltpu


class SparseConvTensor(NamedTuple):
    features: jnp.ndarray      # [N_active, C]
    indices: jnp.ndarray       # [N_active, ndim + 1]  (batch_idx, y, x)
    spatial_shape: tuple       # static
    batch_size: int            # static


def _round_up(x: int, m: int) -> int:
    return ((x + m - 1) // m) * m


def _pick_tile_m(n: int, tile_m_max: int = 512) -> int:
    """Choose the M tile: big for large N, >=2 grid steps for medium N, 8-aligned."""
    n8 = _round_up(max(n, 1), 8)
    if n8 <= 256:
        return n8                                   # one small step
    if n8 <= 2 * tile_m_max:
        # split into >= 2 parallel steps so v7x's 2nd TC / megacore gets work
        return _round_up((n8 + 1) // 2, 256)
    return tile_m_max


def _fused_seq_kernel(f_ref, w1_ref, b1_ref, w2_ref, b2_ref, o_ref):
    # In-kernel cast of the f32 feature tile to bf16 (free VPU filler; avoids a
    # materialized bf16 copy of the features in HBM).
    f = f_ref[...].astype(jnp.bfloat16)
    # Linear 1 (BatchNorm already folded into w1/b1) -- bf16 operands, f32 accumulation.
    h = jnp.dot(f, w1_ref[...], preferred_element_type=jnp.float32)
    h = jnp.maximum(h + b1_ref[...], 0.0)
    # Linear 2 -- cast the f32 intermediate back to bf16 for the MXU.
    y = jnp.dot(h.astype(w2_ref.dtype), w2_ref[...],
                preferred_element_type=jnp.float32)
    o_ref[...] = jnp.maximum(y + b2_ref[...], 0.0).astype(o_ref.dtype)


def fused_feature_pipeline(features, w1, b1, bn_scale, bn_shift, w2, b2,
                           *, tile_m=512):
    """Linear -> BN(eval, folded) -> ReLU -> Linear -> ReLU on [N, Cin] -> [N, Cout]."""
    n, cin = features.shape
    ch = w1.shape[1]
    cout = w2.shape[1]
    out_dtype = features.dtype

    # ---- Fold BatchNorm1d (eval mode) into Linear1: exact. ----
    w1_eff = (w1 * bn_scale).astype(jnp.bfloat16)        # (cin, ch)
    b1_eff = (b1 * bn_scale + bn_shift).astype(jnp.float32)   # (1, ch)
    w2_bf = w2.astype(jnp.bfloat16)                      # (ch, cout)
    b2_f32 = b2.astype(jnp.float32)                      # (1, cout)

    # ---- Tile / grid over N only. No channel padding, no HBM feature copy unless
    # N is not a tile multiple (padded rows are zeros, sliced off afterwards). ----
    tile_m = _pick_tile_m(n, tile_m)
    n_p = _round_up(n, tile_m)
    f = features if n_p == n else jnp.pad(features, ((0, n_p - n), (0, 0)))
    grid = (n_p // tile_m,)

    resident = lambda shape: pl.BlockSpec(shape, lambda i: (0,) * len(shape))

    # ---- Scheduling hints: cost estimate + explicit VMEM budget (covers v5e's
    # 16 MiB default scoped limit; well under v7x's 64 MiB physical VMEM). ----
    flops = 2 * n_p * (cin * ch + ch * cout)
    bytes_accessed = (n_p * cin * 4 + n_p * cout * 4 +
                      2 * (cin * ch + ch * cout) + 4 * (ch + cout))
    cost = pl.CostEstimate(flops=flops, transcendentals=0,
                           bytes_accessed=bytes_accessed)
    vmem_need = (2 * tile_m * cin * 4              # double-buffered f32 feature tiles
                 + 2 * tile_m * cout * 4           # double-buffered f32 output tiles
                 + 2 * 2 * (cin * ch + ch * cout)  # bf16 weights (double buffered)
                 + 2 * 4 * (ch + cout)             # f32 biases
                 + tile_m * (ch + cout) * 4)       # f32 intermediates
    vmem_limit = int(min(max(4 * vmem_need, 16 << 20), 32 << 20))

    out_padded = pl.pallas_call(
        _fused_seq_kernel,
        out_shape=jax.ShapeDtypeStruct((n_p, cout), out_dtype),
        grid_spec=pltpu.PrefetchScalarGridSpec(
            num_scalar_prefetch=0,
            grid=grid,
            in_specs=[
                pl.BlockSpec((tile_m, cin), lambda i: (i, 0)),   # features tile (f32)
                resident((cin, ch)),                              # W1 (BN folded, bf16)
                resident((1, ch)),                                # b1 (f32)
                resident((ch, cout)),                             # W2 (bf16)
                resident((1, cout)),                              # b2 (f32)
            ],
            out_specs=pl.BlockSpec((tile_m, cout), lambda i: (i, 0)),
        ),
        compiler_params=pltpu.CompilerParams(
            dimension_semantics=("parallel",),
            vmem_limit_bytes=vmem_limit),
        cost_estimate=cost,
    )(f, w1_eff, b1_eff, w2_bf, b2_f32)

    return out_padded if n_p == n else out_padded[:n]


def sparse_sequential_forward(x: SparseConvTensor, params) -> SparseConvTensor:
    """SparseSequential.forward: dense sub-modules act on x.features only,
    and only if there is at least one active index (static check here)."""
    if x.indices.shape[0] == 0:
        return x
    new_feats = fused_feature_pipeline(
        x.features, params["w1"], params["b1"],
        params["bn_scale"], params["bn_shift"],
        params["w2"], params["b2"])
    return SparseConvTensor(new_feats, x.indices, x.spatial_shape, x.batch_size)


def make_params(key, cin, ch, cout):
    k1, k2, k3, k4, k5, k6 = jax.random.split(key, 6)
    w1 = jax.random.normal(k1, (cin, ch), jnp.float32) * 0.1
    b1 = jax.random.normal(k2, (1, ch), jnp.float32) * 0.1
    w2 = jax.random.normal(k3, (ch, cout), jnp.float32) * 0.1
    b2 = jax.random.normal(k4, (1, cout), jnp.float32) * 0.1
    # BatchNorm1d(ch) eval-mode parameters, pre-folded to per-channel scale/shift:
    gamma = 1.0 + 0.1 * jax.random.normal(k5, (1, ch), jnp.float32)
    beta = 0.1 * jax.random.normal(k6, (1, ch), jnp.float32)
    running_mean = jnp.zeros((1, ch), jnp.float32)
    running_var = jnp.ones((1, ch), jnp.float32)
    eps = 1e-5
    bn_scale = gamma / jnp.sqrt(running_var + eps)
    bn_shift = beta - running_mean * bn_scale
    return dict(w1=w1, b1=b1, bn_scale=bn_scale, bn_shift=bn_shift,
                w2=w2, b2=b2)


def reference_forward(features, p):
    h = features @ p["w1"] + p["b1"]
    h = h * p["bn_scale"] + p["bn_shift"]
    h = jnp.maximum(h, 0.0)
    y = h @ p["w2"] + p["b2"]
    return jnp.maximum(y, 0.0)


if __name__ == "__main__":
    key = jax.random.PRNGKey(0)
    kf, ki, kp = jax.random.split(key, 3)

    N_ACTIVE = 64          # number of active voxels
    CIN, CH, COUT = 16, 32, 32
    BATCH, H, W = 2, 16, 16

    features = jax.random.normal(kf, (N_ACTIVE, CIN), jnp.float32)
    # indices: (batch_idx, y, x) per active voxel — carried along, not used in compute.
    indices = jax.random.randint(ki, (N_ACTIVE, 3), 0,
                                 jnp.array([BATCH, H, W])).astype(jnp.int32)
    x = SparseConvTensor(features, indices, (H, W), BATCH)

    params = make_params(kp, CIN, CH, COUT)

    out = sparse_sequential_forward(x, params)
    jax.block_until_ready(out.features)

    ref = reference_forward(features, params)
    assert out.features.shape == (N_ACTIVE, COUT)
    # bf16 matmul operands vs f32 reference -> loosened tolerance.
    assert jnp.allclose(out.features, ref, atol=2e-2, rtol=2e-2), "mismatch vs reference"
    # indices / spatial metadata pass through unchanged
    assert out.indices.shape == (N_ACTIVE, 3)

    print("KERNEL_OK")
</pallas_src>

<mosaic_0001>
module attributes {stable_mosaic.version = 11 : i64} {
  func.func @_fused_seq_kernel(%arg0: i32, %arg1: memref<64x16xf32, #tpu.memory_space<vmem>>, %arg2: memref<16x32xbf16, #tpu.memory_space<vmem>>, %arg3: memref<1x32xf32, #tpu.memory_space<vmem>>, %arg4: memref<32x32xbf16, #tpu.memory_space<vmem>>, %arg5: memref<1x32xf32, #tpu.memory_space<vmem>>, %arg6: memref<64x32xf32, #tpu.memory_space<vmem>>) attributes {dimension_semantics = [#tpu.dimension_semantics<parallel>], iteration_bounds = array<i64: 1>, scalar_prefetch = 0 : i64, scratch_operands = 0 : i64, tpu.core_type = #tpu.core_type<tc>, window_params = [{transform_indices = @transform_0, window_bounds = array<i64: 64, 16>}, {pipeline_mode = #tpu.pipeline_mode<synchronous>, transform_indices = @transform_1, window_bounds = array<i64: 16, 32>}, {pipeline_mode = #tpu.pipeline_mode<synchronous>, transform_indices = @transform_2, window_bounds = array<i64: 1, 32>}, {pipeline_mode = #tpu.pipeline_mode<synchronous>, transform_indices = @transform_3, window_bounds = array<i64: 32, 32>}, {pipeline_mode = #tpu.pipeline_mode<synchronous>, transform_indices = @transform_4, window_bounds = array<i64: 1, 32>}, {transform_indices = @transform_5, window_bounds = array<i64: 64, 32>}]} {
    %c0 = arith.constant 0 : index
    %c0_0 = arith.constant 0 : index
    %0 = vector.load %arg1[%c0, %c0_0] : memref<64x16xf32, #tpu.memory_space<vmem>>, vector<64x16xf32>
    %1 = arith.truncf %0 : vector<64x16xf32> to vector<64x16xbf16>
    %c0_1 = arith.constant 0 : index
    %c0_2 = arith.constant 0 : index
    %2 = vector.load %arg2[%c0_1, %c0_2] : memref<16x32xbf16, #tpu.memory_space<vmem>>, vector<16x32xbf16>
    %cst = arith.constant dense<0.000000e+00> : vector<64x32xf32>
    %3 = tpu.matmul %1, %2, %cst {dimension_numbers = #tpu.dot_dimension_numbers<[1], [0], [0], [1], [0, 0, 1, 1], [], []>} : vector<64x16xbf16>, vector<16x32xbf16>, vector<64x32xf32> -> vector<64x32xf32>
    %c0_3 = arith.constant 0 : index
    %c0_4 = arith.constant 0 : index
    %4 = vector.load %arg3[%c0_3, %c0_4] : memref<1x32xf32, #tpu.memory_space<vmem>>, vector<1x32xf32>
    %5 = vector.broadcast %4 : vector<1x32xf32> to vector<64x32xf32>
    %6 = arith.addf %3, %5 : vector<64x32xf32>
    %cst_5 = arith.constant 0.000000e+00 : f32
    %7 = vector.broadcast %cst_5 : f32 to vector<64x32xf32>
    %8 = arith.maximumf %6, %7 : vector<64x32xf32>
    %9 = arith.truncf %8 : vector<64x32xf32> to vector<64x32xbf16>
    %c0_6 = arith.constant 0 : index
    %c0_7 = arith.constant 0 : index
    %10 = vector.load %arg4[%c0_6, %c0_7] : memref<32x32xbf16, #tpu.memory_space<vmem>>, vector<32x32xbf16>
    %cst_8 = arith.constant dense<0.000000e+00> : vector<64x32xf32>
    %11 = tpu.matmul %9, %10, %cst_8 {dimension_numbers = #tpu.dot_dimension_numbers<[1], [0], [0], [1], [0, 0, 1, 1], [], []>} : vector<64x32xbf16>, vector<32x32xbf16>, vector<64x32xf32> -> vector<64x32xf32>
    %c0_9 = arith.constant 0 : index
    %c0_10 = arith.constant 0 : index
    %12 = vector.load %arg5[%c0_9, %c0_10] : memref<1x32xf32, #tpu.memory_space<vmem>>, vector<1x32xf32>
    %13 = vector.broadcast %12 : vector<1x32xf32> to vector<64x32xf32>
    %14 = arith.addf %11, %13 : vector<64x32xf32>
    %cst_11 = arith.constant 0.000000e+00 : f32
    %15 = vector.broadcast %cst_11 : f32 to vector<64x32xf32>
    %16 = arith.maximumf %14, %15 : vector<64x32xf32>
    %c0_12 = arith.constant 0 : index
    %c0_13 = arith.constant 0 : index
    %17 = vector.load %arg6[%c0_12, %c0_13] : memref<64x32xf32, #tpu.memory_space<vmem>>, vector<64x32xf32>
    tpu.vector_store %arg6[%c0_12, %c0_13], %16 {strides = array<i32>} : memref<64x32xf32, #tpu.memory_space<vmem>>, vector<64x32xf32>,
    return
  }
  func.func @transform_0(%arg0: i32) -> (i32, i32) {
    %c0_i32 = arith.constant 0 : i32
    %c0_i32_0 = arith.constant 0 : i32
    return %arg0, %c0_i32 : i32, i32
  }
  func.func @transform_1(%arg0: i32) -> (i32, i32) {
    %c0_i32 = arith.constant 0 : i32
    %c0_i32_0 = arith.constant 0 : i32
    %c0_i32_1 = arith.constant 0 : i32
    return %c0_i32, %c0_i32_0 : i32, i32
  }
  func.func @transform_2(%arg0: i32) -> (i32, i32) {
    %c0_i32 = arith.constant 0 : i32
    %c0_i32_0 = arith.constant 0 : i32
    %c0_i32_1 = arith.constant 0 : i32
    return %c0_i32, %c0_i32_0 : i32, i32
  }
  func.func @transform_3(%arg0: i32) -> (i32, i32) {
    %c0_i32 = arith.constant 0 : i32
    %c0_i32_0 = arith.constant 0 : i32
    %c0_i32_1 = arith.constant 0 : i32
    return %c0_i32, %c0_i32_0 : i32, i32
  }
  func.func @transform_4(%arg0: i32) -> (i32, i32) {
    %c0_i32 = arith.constant 0 : i32
    %c0_i32_0 = arith.constant 0 : i32
    %c0_i32_1 = arith.constant 0 : i32
    return %c0_i32, %c0_i32_0 : i32, i32
  }
  func.func @transform_5(%arg0: i32) -> (i32, i32) {
    %c0_i32 = arith.constant 0 : i32
    %c0_i32_0 = arith.constant 0 : i32
    return %arg0, %c0_i32 : i32, i32
  }
}

</mosaic_0001>

<llo_original>
// kernel: tpu_custom_call.1
$region0: #{tpu_custom_call.1}
  #allocation0 [shape = 'u32[]', space=smem, size = 0x4, offset = 0x4, fixed_abs, tag = 'smem constant byte address 0x4 - core index']
  #allocation1 [shape = 'u32[72,128]{1,0:T(1,128)}', space=vmem, size = 0x9000, scoped, tag = 'internal scratch']
  %s0 = inlined_call_operand.vmem [shape: f32[64,16], index: 0, kind: input, shape index: {}]
  %s1 = inlined_call_operand.vmem [shape: bf16[16,32], index: 1, kind: input, shape index: {}]
  %s2 = inlined_call_operand.vmem [shape: f32[1,32], index: 2, kind: input, shape index: {}]
  %s3 = inlined_call_operand.vmem [shape: bf16[32,32], index: 3, kind: input, shape index: {}]
  %s4 = inlined_call_operand.vmem [shape: f32[1,32], index: 4, kind: input, shape index: {}]
  %s5 = inlined_call_operand.vmem [shape: f32[64,32], index: 5, kind: output, shape index: {}]
  %s6 = sld [smem:[#allocation0]]
  $region30: #{tpu_custom_call.1} parent=0
    _
  %s8 = ssub.s32 1, %s6
  %s9 = scalar_select 0, %s8, %s6
  // Predicated region
  $region2: #{tpu_custom_call.1} parent=0 // pred_check
    _
  $region3: #{tpu_custom_call.1} parent=0 // pred_check_branch
    %11 = sbr.rel (0) target = $region5
  $region4: #{tpu_custom_call.1} parent=0 // pred_region
    _
  $region5: #{tpu_custom_call.1} parent=0 // pred_fallthru
    _
  // Predicated region
  $region6: #{tpu_custom_call.1} parent=0 // pred_check
    _
  $region7: #{tpu_custom_call.1} parent=0 // pred_check_branch
    %13 = sbr.rel (0) target = $region9
  $region8: #{tpu_custom_call.1} parent=0 // pred_region
    _
  $region9: #{tpu_custom_call.1} parent=0 // pred_fallthru
    _
  // Predicated region
  $region10: #{tpu_custom_call.1} parent=0 // pred_check
    _
  $region11: #{tpu_custom_call.1} parent=0 // pred_check_branch
    %15 = sbr.rel (0) target = $region13
  $region12: #{tpu_custom_call.1} parent=0 // pred_region
    _
  $region13: #{tpu_custom_call.1} parent=0 // pred_fallthru
    _
  // Predicated region
  $region14: #{tpu_custom_call.1} parent=0 // pred_check
    _
  $region15: #{tpu_custom_call.1} parent=0 // pred_check_branch
    %17 = sbr.rel (0) target = $region17
  $region16: #{tpu_custom_call.1} parent=0 // pred_region
    _
  $region17: #{tpu_custom_call.1} parent=0 // pred_fallthru
    _
  // Predicated region
  $region18: #{tpu_custom_call.1} parent=0 // pred_check
    _
  $region19: #{tpu_custom_call.1} parent=0 // pred_check_branch
    %19 = sbr.rel (0) target = $region21
  $region20: #{tpu_custom_call.1} parent=0 // pred_region
    _
  $region21: #{tpu_custom_call.1} parent=0 // pred_fallthru
    _
  %v21 = vld [vmem:[%s0] sm:$0xff]
  %v22 = vld [vmem:[%s0 + $0x8] sm:$0xff]
  %v23 = vld [vmem:[%s0 + $0x10] sm:$0xff]
  %v24 = vld [vmem:[%s0 + $0x18] sm:$0xff]
  %v25 = vld [vmem:[%s0 + $0x20] sm:$0xff]
  %v26 = vld [vmem:[%s0 + $0x28] sm:$0xff]
  %v27 = vld [vmem:[%s0 + $0x30] sm:$0xff]
  %v28 = vld [vmem:[%s0 + $0x38] sm:$0xff]
  %v29 = vpack.c.bf16 %v22, %v21
  %v30 = vpack.c.bf16 %v24, %v23
  %v31 = vpack.c.bf16 %v26, %v25
  %v32 = vpack.c.bf16 %v28, %v27
  %v33 = vld [vmem:[%s1] sm:$0xf]
  %v34 = vld [vmem:[%s1 + $0x4] sm:$0xf]
  %v35 = vld [vmem:[%s2] sm:$0x1]
  %v37 = vperm.slane %v35, 0
  %v41 = vunpack.c.l.b16 %v33
  %v42 = vunpack.c.l.b16 %v34
  %v43 = vpack.c.b16 %v42, %v41
  %vm45 = vcmask 130048
  %v47 = vsel %vm45, %v29, 0
  %v50 = vsel %vm45, %v30, 0
  %v53 = vsel %vm45, %v31, 0
  %v56 = vsel %vm45, %v32, 0
  %58 = vmatpush.bf16.msra.mxu0 0
  %59 = vmatpush.bf16.msra.mxu0 0
  %60 = vmatpush.bf16.msra.mxu0 0
  %61 = vmatpush.bf16.msra.mxu0 0
  %62 = vmatpush.bf16.msra.mxu0 0
  %63 = vmatpush.bf16.msra.mxu0 0
  %64 = vmatpush.bf16.msra.mxu0 0
  %65 = vmatpush.bf16.msra.mxu0 %v43
  %66 = vmatmul.bf16.gmra.mxu0 %v47
  %v67 = vpop.f32.mrf.mxu0
  %v68 = vadd.f32 %v37, %v67
  %v69 = vpop.f32.mrf.mxu0
  %v70 = vadd.f32 %v37, %v69
  %71 = vmatmul.bf16.gmra.mxu0 %v50
  %v72 = vpop.f32.mrf.mxu0
  %v73 = vadd.f32 %v37, %v72
  %v74 = vpop.f32.mrf.mxu0
  %v75 = vadd.f32 %v37, %v74
  %76 = vmatmul.bf16.gmra.mxu0 %v53
  %v77 = vpop.f32.mrf.mxu0
  %v78 = vadd.f32 %v37, %v77
  %v79 = vpop.f32.mrf.mxu0
  %v80 = vadd.f32 %v37, %v79
  %81 = vmatmul.bf16.gmra.mxu0 %v56
  %v82 = vpop.f32.mrf.mxu0
  %v83 = vadd.f32 %v37, %v82
  %v84 = vpop.f32.mrf.mxu0
  %v85 = vadd.f32 %v37, %v84
  %86 = vdwg.mxu0
  %v87 = vmax.f32 %v68, 0.0
  %v88 = vmax.f32 %v70, 0.0
  %v89 = vmax.f32 %v73, 0.0
  %v90 = vmax.f32 %v75, 0.0
  %v91 = vmax.f32 %v78, 0.0
  %v92 = vmax.f32 %v80, 0.0
  %v93 = vmax.f32 %v83, 0.0
  %v94 = vmax.f32 %v85, 0.0
  %v95 = vpack.c.bf16 %v88, %v87
  %v96 = vpack.c.bf16 %v90, %v89
  %v97 = vpack.c.bf16 %v92, %v91
  %v98 = vpack.c.bf16 %v94, %v93
  %v99 = vld [vmem:[%s3] sm:$0xf]
  %v100 = vld [vmem:[%s3 + $0x4] sm:$0xf]
  %v101 = vld [vmem:[%s3 + $0x8] sm:$0xf]
  %v102 = vld [vmem:[%s3 + $0xc] sm:$0xf]
  %v103 = vld [vmem:[%s4] sm:$0x1]
  %v105 = vperm.slane %v103, 0
  %v111 = vunpack.c.l.b16 %v99
  %v112 = vunpack.c.l.b16 %v100
  %v113 = vunpack.c.l.b16 %v101
  %v114 = vunpack.c.l.b16 %v102
  %v115 = vpack.c.b16 %v112, %v111
  %v116 = vpack.c.b16 %v114, %v113
  %vm119 = vcmask 261120
  %v121 = vsel %vm119, %v95, 0
  %v124 = vsel %vm119, %v96, 0
  %v127 = vsel %vm119, %v97, 0
  %v130 = vsel %vm119, %v98, 0
  %132 = vmatpush.bf16.msra.mxu0 0
  %133 = vmatpush.bf16.msra.mxu0 0
  %134 = vmatpush.bf16.msra.mxu0 0
  %135 = vmatpush.bf16.msra.mxu0 0
  %136 = vmatpush.bf16.msra.mxu0 0
  %137 = vmatpush.bf16.msra.mxu0 0
  %138 = vmatpush.bf16.msra.mxu0 %v116
  %139 = vmatpush.bf16.msra.mxu0 %v115
  %140 = vmatmul.bf16.gmra.mxu0 %v121
  %v141 = vpop.f32.mrf.mxu0
  %v142 = vadd.f32 %v105, %v141
  %v143 = vpop.f32.mrf.mxu0
  %v144 = vadd.f32 %v105, %v143
  %145 = vmatmul.bf16.gmra.mxu0 %v124
  %v146 = vpop.f32.mrf.mxu0
  %v147 = vadd.f32 %v105, %v146
  %v148 = vpop.f32.mrf.mxu0
  %v149 = vadd.f32 %v105, %v148
  %150 = vmatmul.bf16.gmra.mxu0 %v127
  %v151 = vpop.f32.mrf.mxu0
  %v152 = vadd.f32 %v105, %v151
  %v153 = vpop.f32.mrf.mxu0
  %v154 = vadd.f32 %v105, %v153
  %155 = vmatmul.bf16.gmra.mxu0 %v130
  %v156 = vpop.f32.mrf.mxu0
  %v157 = vadd.f32 %v105, %v156
  %v158 = vpop.f32.mrf.mxu0
  %v159 = vadd.f32 %v105, %v158
  %160 = vdwg.mxu0
  %v161 = vmax.f32 %v142, 0.0
  %v162 = vmax.f32 %v144, 0.0
  %v163 = vmax.f32 %v147, 0.0
  %v164 = vmax.f32 %v149, 0.0
  %v165 = vmax.f32 %v152, 0.0
  %v166 = vmax.f32 %v154, 0.0
  %v167 = vmax.f32 %v157, 0.0
  %v168 = vmax.f32 %v159, 0.0
  %169 = vst.msk [vmem:[%s5] sm:$0xff] %vm119, %v161
  %170 = vst.msk [vmem:[%s5 + $0x8] sm:$0xff] %vm119, %v162
  %171 = vst.msk [vmem:[%s5 + $0x10] sm:$0xff] %vm119, %v163
  %172 = vst.msk [vmem:[%s5 + $0x18] sm:$0xff] %vm119, %v164
  %173 = vst.msk [vmem:[%s5 + $0x20] sm:$0xff] %vm119, %v165
  %174 = vst.msk [vmem:[%s5 + $0x28] sm:$0xff] %vm119, %v166
  %175 = vst.msk [vmem:[%s5 + $0x30] sm:$0xff] %vm119, %v167
  %176 = vst.msk [vmem:[%s5 + $0x38] sm:$0xff] %vm119, %v168
  // Predicated region
  $region22: #{tpu_custom_call.1} parent=0 // pred_check
    _
  $region23: #{tpu_custom_call.1} parent=0 // pred_check_branch
    %178 = sbr.rel (0) target = $region25
  $region24: #{tpu_custom_call.1} parent=0 // pred_region
    _
  $region25: #{tpu_custom_call.1} parent=0 // pred_fallthru
    _
  // Predicated region
  $region26: #{tpu_custom_call.1} parent=0 // pred_check
    _
  $region27: #{tpu_custom_call.1} parent=0 // pred_check_branch
    %180 = sbr.rel (0) target = $region29
  $region28: #{tpu_custom_call.1} parent=0 // pred_region
    _
  $region29: #{tpu_custom_call.1} parent=0 // pred_fallthru
    _

</llo_original>
